<compile_context>
chip_gen: v5e
topology: v5e:2x2
jax: 0.10.0
libtpu: 0.0.40
codegen_flags: <defaults>
</compile_context>

<pallas_src>
import jax
import jax.numpy as jnp
from jax.experimental import pallas as pl
from jax.experimental.pallas import tpu as pltpu


# ---------------------------------------------------------------------------
# Fixed-point fake-quantization (round to 1/2^8 grid, saturate to int16 range).
# TODO(synk): the original `quantize()` from quantized_gru.py is not shown in the
# snippet; this uses the standard round+clamp fixed-point quantizer used by such repos.
FRAC_BITS = 8
_SCALE = float(2 ** FRAC_BITS)
_INV_SCALE = 1.0 / _SCALE
_QMIN = float(-(2 ** 15))
_QMAX = float(2 ** 15 - 1)

OUT_LANES = 128  # lane-dense output slab width (multiple of 128 -> unmasked stores)


def quantize(x):
    return jnp.clip(jnp.round(x * _SCALE), _QMIN, _QMAX) * _INV_SCALE


# ---------------------------------------------------------------------------
# Pallas kernel: entire FCNN forward (matmul + bias + relu + dot + quantization)
# for one batch tile, fully VMEM-resident.
def fcnn_kernel(x_ref, w1t_ref, b1_ref, w2_ref, b2_ref, o_ref):
    x = x_ref[...]                                                     # (TB, H)

    # ----- QuantizedLinear 1 (MXU) -----
    h = jnp.dot(x, w1t_ref[...], preferred_element_type=jnp.float32)  # (TB, Hh)
    h = quantize(h)                                                    # quantize(matmul)
    h = quantize(h + b1_ref[...])                                      # quantize(+ bias)
    # (outer quantize in FCNN.forward is idempotent here -> elided, no numerical change)

    # ----- ReLU -----
    h = jnp.maximum(h, 0.0)

    # ----- QuantizedLinear 2 (output width 1 -> VPU multiply + lane reduction) -----
    y = jnp.sum(h * w2_ref[...], axis=-1, keepdims=True)               # (TB, 1)
    y = quantize(y)                                                    # quantize(matmul)
    y = quantize(y + b2_ref[0])                                        # quantize(+ bias), b2 from SMEM
    # (outer quantize elided, idempotent)

    # Lane-dense writeback: broadcast the per-row scalar across 128 lanes; the
    # wrapper slices [:, :1].  Avoids masked vst.msk partial stores.
    o_ref[...] = jnp.broadcast_to(y, o_ref.shape).astype(o_ref.dtype)


# ---------------------------------------------------------------------------
def prepare_fcnn_params(w1, b1, w2, b2):
    """One-time (init) parameter prep — do NOT call per forward.

    w1: (Hh, H) torch-layout [out, in];  b1: (Hh,);  w2: (1, Hh);  b2: (1,).
    """
    w1t = jnp.asarray(w1, jnp.float32).T               # (H, Hh)  pre-transposed once
    b1r = jnp.asarray(b1, jnp.float32).reshape(1, -1)  # (1, Hh)
    w2r = jnp.asarray(w2, jnp.float32).reshape(1, -1)  # (1, Hh)  row vector, no transpose needed
    b2r = jnp.asarray(b2, jnp.float32).reshape(-1)     # (1,)     scalar -> SMEM
    return w1t, b1r, w2r, b2r


def quantized_fcnn(x, w1t, b1r, w2r, b2r):
    """x: (B, H) f32; params as returned by prepare_fcnn_params. Returns (B, 1) f32."""
    B, H = x.shape
    Hh = w1t.shape[1]

    # Batch tiling: largest tile that comfortably fits VMEM (trivial at these widths;
    # cap keeps the same constants safe on v7x's 64 MiB VMEM if H ever scales).
    tile_b = B if B <= 512 else 512
    assert B % tile_b == 0, "batch must be a multiple of the batch tile"
    grid = (B // tile_b,)

    y_wide = pl.pallas_call(
        fcnn_kernel,
        out_shape=jax.ShapeDtypeStruct((B, OUT_LANES), jnp.float32),
        grid=grid,
        in_specs=[
            pl.BlockSpec((tile_b, H), lambda i: (i, 0)),      # x tile (pipelined over batch)
            pl.BlockSpec((H, Hh), lambda i: (0, 0)),          # W1^T, resident
            pl.BlockSpec((1, Hh), lambda i: (0, 0)),          # b1, resident
            pl.BlockSpec((1, Hh), lambda i: (0, 0)),          # w2 row, resident
            pl.BlockSpec(memory_space=pltpu.MemorySpace.SMEM),  # b2 scalar in SMEM
        ],
        out_specs=pl.BlockSpec((tile_b, OUT_LANES), lambda i: (i, 0)),
        compiler_params=pltpu.CompilerParams(
            dimension_semantics=("parallel",)),               # lets v7x shard batch across TCs
    )(x, w1t, b1r, w2r, b2r)

    return y_wide[:, :1]


# ---------------------------------------------------------------------------
if __name__ == "__main__":
    hidden_size = 32          # FCNN hidden size; linear1: 32 -> 16, linear2: 16 -> 1
    batch = 8

    key = jax.random.PRNGKey(0)
    kx, kw1, kb1, kw2, kb2 = jax.random.split(key, 5)

    x = jax.random.normal(kx, (batch, hidden_size), dtype=jnp.float32)

    # Parameters, quantized at init (mirrors QuantizeTensor.apply(weights[...]) in __init__).
    w1 = quantize(jax.random.normal(kw1, (hidden_size // 2, hidden_size), jnp.float32) * 0.1)
    b1 = quantize(jax.random.normal(kb1, (hidden_size // 2,), jnp.float32) * 0.1)
    w2 = quantize(jax.random.normal(kw2, (1, hidden_size // 2), jnp.float32) * 0.1)
    b2 = quantize(jax.random.normal(kb2, (1,), jnp.float32) * 0.1)

    # One-time prep (transposes / reshapes hoisted out of the per-call path).
    params = prepare_fcnn_params(w1, b1, w2, b2)

    fcnn = jax.jit(quantized_fcnn)
    out = fcnn(x, *params)
    out = jax.block_until_ready(out)

    # Pure-JAX reference of the FULL original forward semantics (incl. outer quantizes).
    h_ref = quantize(quantize(quantize(x @ w1.T) + b1))
    y_ref = quantize(quantize(quantize(jnp.maximum(h_ref, 0.0) @ w2.T) + b2))
    assert out.shape == (batch, 1)
    assert jnp.allclose(out, y_ref, atol=1e-6), "mismatch vs reference"

    print("KERNEL_OK")
</pallas_src>

<mosaic_0001>
module attributes {stable_mosaic.version = 11 : i64} {
  func.func @fcnn_kernel(%arg0: i32, %arg1: memref<8x32xf32, #tpu.memory_space<vmem>>, %arg2: memref<32x16xf32, #tpu.memory_space<vmem>>, %arg3: memref<1x16xf32, #tpu.memory_space<vmem>>, %arg4: memref<1x16xf32, #tpu.memory_space<vmem>>, %arg5: memref<1xf32, #tpu.memory_space<smem>>, %arg6: memref<8x128xf32, #tpu.memory_space<vmem>>) attributes {dimension_semantics = [#tpu.dimension_semantics<parallel>], iteration_bounds = array<i64: 1>, scalar_prefetch = 0 : i64, scratch_operands = 0 : i64, tpu.core_type = #tpu.core_type<tc>, window_params = [{transform_indices = @transform_0, window_bounds = array<i64: 8, 32>}, {pipeline_mode = #tpu.pipeline_mode<synchronous>, transform_indices = @transform_1, window_bounds = array<i64: 32, 16>}, {pipeline_mode = #tpu.pipeline_mode<synchronous>, transform_indices = @transform_2, window_bounds = array<i64: 1, 16>}, {pipeline_mode = #tpu.pipeline_mode<synchronous>, transform_indices = @transform_3, window_bounds = array<i64: 1, 16>}, {transform_indices = @transform_4, window_bounds = array<i64: 1>}, {transform_indices = @transform_5, window_bounds = array<i64: 8, 128>}]} {
    %c0 = arith.constant 0 : index
    %c0_0 = arith.constant 0 : index
    %0 = vector.load %arg1[%c0, %c0_0] : memref<8x32xf32, #tpu.memory_space<vmem>>, vector<8x32xf32>
    %c0_1 = arith.constant 0 : index
    %c0_2 = arith.constant 0 : index
    %1 = vector.load %arg2[%c0_1, %c0_2] : memref<32x16xf32, #tpu.memory_space<vmem>>, vector<32x16xf32>
    %cst = arith.constant dense<0.000000e+00> : vector<8x16xf32>
    %2 = tpu.matmul %0, %1, %cst {dimension_numbers = #tpu.dot_dimension_numbers<[1], [0], [0], [1], [0, 0, 1, 1], [], []>} : vector<8x32xf32>, vector<32x16xf32>, vector<8x16xf32> -> vector<8x16xf32>
    %cst_3 = arith.constant 2.560000e+02 : f32
    %3 = vector.broadcast %cst_3 : f32 to vector<8x16xf32>
    %4 = arith.mulf %2, %3 : vector<8x16xf32>
    %5 = math.roundeven %4 : vector<8x16xf32>
    %cst_4 = arith.constant -3.276800e+04 : f32
    %cst_5 = arith.constant 3.276700e+04 : f32
    %6 = vector.broadcast %cst_4 : f32 to vector<8x16xf32>
    %7 = arith.maximumf %6, %5 : vector<8x16xf32>
    %8 = vector.broadcast %cst_5 : f32 to vector<8x16xf32>
    %9 = arith.minimumf %8, %7 : vector<8x16xf32>
    %cst_6 = arith.constant 3.906250e-03 : f32
    %10 = vector.broadcast %cst_6 : f32 to vector<8x16xf32>
    %11 = arith.mulf %9, %10 : vector<8x16xf32>
    %c0_7 = arith.constant 0 : index
    %c0_8 = arith.constant 0 : index
    %12 = vector.load %arg3[%c0_7, %c0_8] : memref<1x16xf32, #tpu.memory_space<vmem>>, vector<1x16xf32>
    %13 = vector.broadcast %12 : vector<1x16xf32> to vector<8x16xf32>
    %14 = arith.addf %11, %13 : vector<8x16xf32>
    %cst_9 = arith.constant 2.560000e+02 : f32
    %15 = vector.broadcast %cst_9 : f32 to vector<8x16xf32>
    %16 = arith.mulf %14, %15 : vector<8x16xf32>
    %17 = math.roundeven %16 : vector<8x16xf32>
    %cst_10 = arith.constant -3.276800e+04 : f32
    %cst_11 = arith.constant 3.276700e+04 : f32
    %18 = vector.broadcast %cst_10 : f32 to vector<8x16xf32>
    %19 = arith.maximumf %18, %17 : vector<8x16xf32>
    %20 = vector.broadcast %cst_11 : f32 to vector<8x16xf32>
    %21 = arith.minimumf %20, %19 : vector<8x16xf32>
    %cst_12 = arith.constant 3.906250e-03 : f32
    %22 = vector.broadcast %cst_12 : f32 to vector<8x16xf32>
    %23 = arith.mulf %21, %22 : vector<8x16xf32>
    %cst_13 = arith.constant 0.000000e+00 : f32
    %24 = vector.broadcast %cst_13 : f32 to vector<8x16xf32>
    %25 = arith.maximumf %23, %24 : vector<8x16xf32>
    %c0_14 = arith.constant 0 : index
    %c0_15 = arith.constant 0 : index
    %26 = vector.load %arg4[%c0_14, %c0_15] : memref<1x16xf32, #tpu.memory_space<vmem>>, vector<1x16xf32>
    %27 = vector.broadcast %26 : vector<1x16xf32> to vector<8x16xf32>
    %28 = arith.mulf %25, %27 : vector<8x16xf32>
    %cst_16 = arith.constant dense<0.000000e+00> : vector<8xf32>
    %29 = vector.multi_reduction <add>, %28, %cst_16 [1] : vector<8x16xf32> to vector<8xf32>
    %30 = vector.shape_cast %29 : vector<8xf32> to vector<8x1xf32>
    %cst_17 = arith.constant 2.560000e+02 : f32
    %31 = vector.broadcast %cst_17 : f32 to vector<8x1xf32>
    %32 = arith.mulf %30, %31 : vector<8x1xf32>
    %33 = math.roundeven %32 : vector<8x1xf32>
    %cst_18 = arith.constant -3.276800e+04 : f32
    %cst_19 = arith.constant 3.276700e+04 : f32
    %34 = vector.broadcast %cst_18 : f32 to vector<8x1xf32>
    %35 = arith.maximumf %34, %33 : vector<8x1xf32>
    %36 = vector.broadcast %cst_19 : f32 to vector<8x1xf32>
    %37 = arith.minimumf %36, %35 : vector<8x1xf32>
    %cst_20 = arith.constant 3.906250e-03 : f32
    %38 = vector.broadcast %cst_20 : f32 to vector<8x1xf32>
    %39 = arith.mulf %37, %38 : vector<8x1xf32>
    %c0_21 = arith.constant 0 : index
    %40 = memref.load %arg5[%c0_21] : memref<1xf32, #tpu.memory_space<smem>>
    %41 = vector.broadcast %40 : f32 to vector<8x1xf32>
    %42 = arith.addf %39, %41 : vector<8x1xf32>
    %cst_22 = arith.constant 2.560000e+02 : f32
    %43 = vector.broadcast %cst_22 : f32 to vector<8x1xf32>
    %44 = arith.mulf %42, %43 : vector<8x1xf32>
    %45 = math.roundeven %44 : vector<8x1xf32>
    %cst_23 = arith.constant -3.276800e+04 : f32
    %cst_24 = arith.constant 3.276700e+04 : f32
    %46 = vector.broadcast %cst_23 : f32 to vector<8x1xf32>
    %47 = arith.maximumf %46, %45 : vector<8x1xf32>
    %48 = vector.broadcast %cst_24 : f32 to vector<8x1xf32>
    %49 = arith.minimumf %48, %47 : vector<8x1xf32>
    %cst_25 = arith.constant 3.906250e-03 : f32
    %50 = vector.broadcast %cst_25 : f32 to vector<8x1xf32>
    %51 = arith.mulf %49, %50 : vector<8x1xf32>
    %52 = vector.shape_cast %51 : vector<8x1xf32> to vector<8x1xf32>
    %53 = vector.broadcast %52 : vector<8x1xf32> to vector<8x128xf32>
    %c0_26 = arith.constant 0 : index
    %c0_27 = arith.constant 0 : index
    %54 = vector.load %arg6[%c0_26, %c0_27] : memref<8x128xf32, #tpu.memory_space<vmem>>, vector<8x128xf32>
    tpu.vector_store %arg6[%c0_26, %c0_27], %53 {strides = array<i32>} : memref<8x128xf32, #tpu.memory_space<vmem>>, vector<8x128xf32>,
    return
  }
  func.func @transform_0(%arg0: i32) -> (i32, i32) {
    %c0_i32 = arith.constant 0 : i32
    %c0_i32_0 = arith.constant 0 : i32
    return %arg0, %c0_i32 : i32, i32
  }
  func.func @transform_1(%arg0: i32) -> (i32, i32) {
    %c0_i32 = arith.constant 0 : i32
    %c0_i32_0 = arith.constant 0 : i32
    %c0_i32_1 = arith.constant 0 : i32
    return %c0_i32, %c0_i32_0 : i32, i32
  }
  func.func @transform_2(%arg0: i32) -> (i32, i32) {
    %c0_i32 = arith.constant 0 : i32
    %c0_i32_0 = arith.constant 0 : i32
    %c0_i32_1 = arith.constant 0 : i32
    return %c0_i32, %c0_i32_0 : i32, i32
  }
  func.func @transform_3(%arg0: i32) -> (i32, i32) {
    %c0_i32 = arith.constant 0 : i32
    %c0_i32_0 = arith.constant 0 : i32
    %c0_i32_1 = arith.constant 0 : i32
    return %c0_i32, %c0_i32_0 : i32, i32
  }
  func.func @transform_4(%arg0: i32) -> i32 {
    %c0_i32 = arith.constant 0 : i32
    %c0_i32_0 = arith.constant 0 : i32
    return %c0_i32 : i32
  }
  func.func @transform_5(%arg0: i32) -> (i32, i32) {
    %c0_i32 = arith.constant 0 : i32
    %c0_i32_0 = arith.constant 0 : i32
    return %arg0, %c0_i32 : i32, i32
  }
}

</mosaic_0001>

<llo_original>
// kernel: quantized_fcnn.1
$region0: #{quantized_fcnn.1}
  #allocation0 [shape = 'u32[]', space=smem, size = 0x4, offset = 0x4, fixed_abs, tag = 'smem constant byte address 0x4 - core index']
  #allocation1 [shape = 'u32[72,128]{1,0:T(1,128)}', space=vmem, size = 0x9000, scoped, tag = 'internal scratch']
  #allocation2 [shape = 'f32[1]{0:T(128)S(6)}', space=smem, size = 0x200, scoped, tag = 'scoped memory for quantized_fcnn.1']
  %s0 = inlined_call_operand.vmem [shape: f32[8,32], index: 0, kind: input, shape index: {}]
  %s1 = inlined_call_operand.vmem [shape: f32[32,16], index: 1, kind: input, shape index: {}]
  %s2 = inlined_call_operand.vmem [shape: f32[1,16], index: 2, kind: input, shape index: {}]
  %s3 = inlined_call_operand.vmem [shape: f32[1,16], index: 3, kind: input, shape index: {}]
  %s4 = inlined_call_operand.<no memory space> [shape: f32[1], index: 4, kind: input, shape index: {}]
  %s5 = inlined_call_operand.vmem [shape: f32[8,128], index: 5, kind: output, shape index: {}]
  %s6 = sld [smem:[#allocation0]]
  $region30: #{quantized_fcnn.1} parent=0
    _
  %s8 = ssub.s32 1, %s6
  %s9 = scalar_select 0, %s8, %s6
  %10 = sst [smem:[#allocation2]] %s4
  // Predicated region
  $region2: #{quantized_fcnn.1} parent=0 // pred_check
    _
  $region3: #{quantized_fcnn.1} parent=0 // pred_check_branch
    %12 = sbr.rel (0) target = $region5
  $region4: #{quantized_fcnn.1} parent=0 // pred_region
    _
  $region5: #{quantized_fcnn.1} parent=0 // pred_fallthru
    _
  // Predicated region
  $region6: #{quantized_fcnn.1} parent=0 // pred_check
    _
  $region7: #{quantized_fcnn.1} parent=0 // pred_check_branch
    %14 = sbr.rel (0) target = $region9
  $region8: #{quantized_fcnn.1} parent=0 // pred_region
    _
  $region9: #{quantized_fcnn.1} parent=0 // pred_fallthru
    _
  // Predicated region
  $region10: #{quantized_fcnn.1} parent=0 // pred_check
    _
  $region11: #{quantized_fcnn.1} parent=0 // pred_check_branch
    %16 = sbr.rel (0) target = $region13
  $region12: #{quantized_fcnn.1} parent=0 // pred_region
    _
  $region13: #{quantized_fcnn.1} parent=0 // pred_fallthru
    _
  // Predicated region
  $region14: #{quantized_fcnn.1} parent=0 // pred_check
    _
  $region15: #{quantized_fcnn.1} parent=0 // pred_check_branch
    %18 = sbr.rel (0) target = $region17
  $region16: #{quantized_fcnn.1} parent=0 // pred_region
    _
  $region17: #{quantized_fcnn.1} parent=0 // pred_fallthru
    _
  // Predicated region
  $region18: #{quantized_fcnn.1} parent=0 // pred_check
    _
  $region19: #{quantized_fcnn.1} parent=0 // pred_check_branch
    %20 = sbr.rel (0) target = $region21
  $region20: #{quantized_fcnn.1} parent=0 // pred_region
    _
  $region21: #{quantized_fcnn.1} parent=0 // pred_fallthru
    _
  %v21 = vld [vmem:[%s0] sm:$0xff]
  %v22 = vld [vmem:[%s1] sm:$0xff]
  %v23 = vld [vmem:[%s1 + $0x8] sm:$0xff]
  %v24 = vld [vmem:[%s1 + $0x10] sm:$0xff]
  %v25 = vld [vmem:[%s1 + $0x18] sm:$0xff]
  %vm26 = vcmask 261120
  %v28 = vsel %vm26, %v21, 0
  %30 = vmatpush.msra.mxu0 0.0
  %31 = vmatpush.msra.mxu0 0.0
  %32 = vmatpush.msra.mxu0 0.0
  %33 = vmatpush.msra.mxu0 0.0
  %34 = vmatpush.msra.mxu0 0.0
  %35 = vmatpush.msra.mxu0 0.0
  %36 = vmatpush.msra.mxu0 0.0
  %37 = vmatpush.msra.mxu0 0.0
  %38 = vmatpush.msra.mxu0 0.0
  %39 = vmatpush.msra.mxu0 0.0
  %40 = vmatpush.msra.mxu0 0.0
  %41 = vmatpush.msra.mxu0 0.0
  %42 = vmatpush.msra.mxu0 %v25
  %43 = vmatpush.msra.mxu0 %v24
  %44 = vmatpush.msra.mxu0 %v23
  %45 = vmatpush.msra.mxu0 %v22
  %46 = vmatmul.f32.gmra.mxu0 %v28
  %v47 = vpop.f32.mrf.mxu0
  %v48 = vadd.f32 0.0, %v47
  %49 = vdwg.mxu0
  %v50 = vmul.f32 %v48, 256.0
  %v51 = vround.ne.pseudo %v50
  %v52 = vmax.f32 %v51, -32768.0
  %v53 = vmin.f32 %v52, 32767.0
  %v54 = vmul.f32 %v53, 0.00390625
  %v55 = vld [vmem:[%s2] sm:$0x1]
  %v57 = vperm.slane %v55, 0
  %v59 = vadd.f32 %v54, %v57
  %v60 = vmul.f32 %v59, 256.0
  %v61 = vround.ne.pseudo %v60
  %v62 = vmax.f32 %v61, -32768.0
  %v63 = vmin.f32 %v62, 32767.0
  %v64 = vmul.f32 %v63, 0.00390625
  %v65 = vmax.f32 %v64, 0.0
  %v66 = vld [vmem:[%s3] sm:$0x1]
  %v68 = vperm.slane %v66, 0
  %v70 = vmul.f32 %v65, %v68
  %vm71 = vcmask 130048
  %v72 = vsel %vm71, %v70, 0.0
  %73 = vadd.xlane.f32.xlu0 %v72
  %v74 = vpop.xlane.xlu0 %73
  %v75 = vmul.f32 %v74, 256.0
  %v76 = vround.ne.pseudo %v75
  %v77 = vmax.f32 %v76, -32768.0
  %v78 = vmin.f32 %v77, 32767.0
  %v79 = vmul.f32 %v78, 0.00390625
  %s80 = sld [smem:[#allocation2]]
  %v81 = vstv %s80
  %v82 = vadd.f32 %v79, %v81
  %v83 = vmul.f32 %v82, 256.0
  %v84 = vround.ne.pseudo %v83
  %v85 = vmax.f32 %v84, -32768.0
  %v86 = vmin.f32 %v85, 32767.0
  %v87 = vmul.f32 %v86, 0.00390625
  %88 = vst [vmem:[%s5] sm:$0xff] %v87
  // Predicated region
  $region22: #{quantized_fcnn.1} parent=0 // pred_check
    _
  $region23: #{quantized_fcnn.1} parent=0 // pred_check_branch
    %90 = sbr.rel (0) target = $region25
  $region24: #{quantized_fcnn.1} parent=0 // pred_region
    _
  $region25: #{quantized_fcnn.1} parent=0 // pred_fallthru
    _
  // Predicated region
  $region26: #{quantized_fcnn.1} parent=0 // pred_check
    _
  $region27: #{quantized_fcnn.1} parent=0 // pred_check_branch
    %92 = sbr.rel (0) target = $region29
  $region28: #{quantized_fcnn.1} parent=0 // pred_region
    _
  $region29: #{quantized_fcnn.1} parent=0 // pred_fallthru
    _

</llo_original>
